<compile_context>
chip_gen: v6e
topology: v6e:2x2x1
jax: 0.10.0
libtpu: 0.0.40
codegen_flags: <defaults>
</compile_context>

<pallas_src>
import jax
import jax.numpy as jnp
from jax.experimental import pallas as pl
from jax.experimental.pallas import tpu as pltpu


def _neuron_kernel(w_ref, b_ref, x_ref, o_ref):
    """One batch tile of the NeuronModel forward.

    w_ref: (H, F, I, 1)  -- VMEM-resident across grid steps
    b_ref: (F, I, 1)     -- VMEM-resident across grid steps
    x_ref: (F, I, TB)    -- lane-dense batch tile
    o_ref: (F, I, TB)
    """
    H = w_ref.shape[0]
    F = x_ref.shape[0]

    # Hoist all tiny loads once (no re-load / re-broadcast inside the FMA chains).
    x = [x_ref[f].astype(jnp.float32) for f in range(F)]                 # F x (I, TB)
    w = [[w_ref[h, f].astype(jnp.float32) for f in range(F)]             # H x F x (I, 1)
         for h in range(H)]
    b = [b_ref[f].astype(jnp.float32) for f in range(F)]                 # F x (I, 1)

    # hidden[h] = relu(sum_f x[f] * W[:, h, f])   -- unrolled VPU FMAs
    hidden = []
    for h in range(H):
        acc = x[0] * w[h][0]
        for f in range(1, F):
            acc = acc + x[f] * w[h][f]
        hidden.append(jnp.maximum(acc, 0.0))

    # out[f] = relu(sum_h hidden[h] * W[:, h, f] + b_final[:, f])
    for f in range(F):
        acc = b[f] + hidden[0] * w[0][f]
        for h in range(1, H):
            acc = acc + hidden[h] * w[h][f]
        o_ref[f] = jnp.maximum(acc, 0.0).astype(o_ref.dtype)


def _xla_forward(features, W, b_final):
    """Reference / small-size path: fused XLA einsums."""
    h = jnp.maximum(jnp.einsum('...if,ihf->...ih', features, W), 0.0)
    return jnp.maximum(jnp.einsum('...ih,ihf->...if', h, W) + b_final, 0.0)


def neuron_model_forward(features, W, b_final, *, batch_block=1024,
                         min_pallas_bytes=1 << 20, force_pallas=False):
    """features: [..., I, F]; W: [I, H, F]; b_final: [I, F] -> out: [..., I, F]."""
    *lead, I, F = features.shape
    I_w, H, F_w = W.shape
    assert I == I_w and F == F_w
    assert b_final.shape == (I, F)

    # Size gate: at toy sizes the kernel dispatch + DMAs dominate -> use XLA.
    if not force_pallas and features.size * features.dtype.itemsize < min_pallas_bytes:
        return _xla_forward(features, W, b_final)

    B = 1
    for d in lead:
        B *= d
    x = features.reshape(B, I, F)

    # Lane-dense repack (layout plumbing in the wrapper, not extra compute).
    x_t = jnp.transpose(x, (2, 1, 0))                   # (F, I, B), batch on lanes
    w_t = jnp.transpose(W, (1, 2, 0))[..., None]        # (H, F, I, 1)
    b_t = jnp.transpose(b_final, (1, 0))[..., None]     # (F, I, 1)

    if B <= batch_block:
        tb, b_pad, n_tiles = B, B, 1                    # single full-extent block
    else:
        tb = batch_block                                # multiple of 128 lanes
        n_tiles = pl.cdiv(B, tb)
        b_pad = n_tiles * tb
        if b_pad != B:
            x_t = jnp.pad(x_t, ((0, 0), (0, 0), (0, b_pad - B)))

    # VMEM budget: double-buffered x + out tiles, plus resident W / b_final.
    itemsize = jnp.dtype(features.dtype).itemsize
    tile_bytes = F * I * tb * itemsize
    needed = 4 * tile_bytes + (H * F * I + F * I) * 4 * 128  # generous per-tile padding
    vmem_limit = int(min(100 * 1024 * 1024, max(32 * 1024 * 1024, 2 * needed)))

    out_t = pl.pallas_call(
        _neuron_kernel,
        out_shape=jax.ShapeDtypeStruct((F, I, b_pad), features.dtype),
        grid=(n_tiles,),
        in_specs=[
            pl.BlockSpec((H, F, I, 1), lambda bt: (0, 0, 0, 0)),  # W: resident
            pl.BlockSpec((F, I, 1), lambda bt: (0, 0, 0)),        # b_final: resident
            pl.BlockSpec((F, I, tb), lambda bt: (0, 0, bt)),      # batch tile
        ],
        out_specs=pl.BlockSpec((F, I, tb), lambda bt: (0, 0, bt)),
        compiler_params=pltpu.CompilerParams(
            dimension_semantics=("parallel",),   # shards batch tiles across v7x TCs
            vmem_limit_bytes=vmem_limit,
        ),
    )(w_t, b_t, x_t)

    out = jnp.transpose(out_t[:, :, :B], (2, 1, 0))     # back to (B, I, F)
    return out.reshape(*lead, I, F)


if __name__ == "__main__":
    # Config: n_instances=8, n_features=5, n_hidden=2 (module defaults + 8 instances)
    n_instances, n_features, n_hidden = 8, 5, 2

    key = jax.random.PRNGKey(0)
    k_w, k_b, k_x1, k_x2 = jax.random.split(key, 4)

    # xavier_normal_ on W of shape (I, H, F): fan_in = H*F, fan_out = I*F
    fan_in = n_hidden * n_features
    fan_out = n_instances * n_features
    std = (2.0 / (fan_in + fan_out)) ** 0.5
    W = std * jax.random.normal(
        k_w, (n_instances, n_hidden, n_features), dtype=jnp.float32)
    # b_final is zero-initialized in the module; use nonzero values to exercise the bias path.
    b_final = 0.1 * jax.random.normal(
        k_b, (n_instances, n_features), dtype=jnp.float32)

    # generate_batch-style inputs: uniform in [-1, 1], feature_probability = 1
    def gen(k, batch):
        return 2.0 * jax.random.uniform(
            k, (batch, n_instances, n_features), dtype=jnp.float32) - 1.0

    # Case A: tiny batch, single full-extent block (forces the Pallas path).
    feat_a = gen(k_x1, 4)
    out_a = jax.block_until_ready(
        neuron_model_forward(feat_a, W, b_final, force_pallas=True))
    ref_a = _reference = _xla_forward(feat_a, W, b_final)
    assert out_a.shape == feat_a.shape
    assert jnp.allclose(out_a, ref_a, atol=1e-5, rtol=1e-5)

    # Case B: batch not a multiple of the block -> padding + 2-step parallel grid.
    feat_b = gen(k_x2, 200)
    out_b = jax.block_until_ready(
        neuron_model_forward(feat_b, W, b_final, batch_block=128, force_pallas=True))
    ref_b = _xla_forward(feat_b, W, b_final)
    assert out_b.shape == feat_b.shape
    assert jnp.allclose(out_b, ref_b, atol=1e-5, rtol=1e-5)

    # Case C: size gate dispatches tiny problems to plain XLA (same semantics).
    out_c = jax.block_until_ready(neuron_model_forward(feat_a, W, b_final))
    assert jnp.allclose(out_c, ref_a, atol=1e-5, rtol=1e-5)

    print("KERNEL_OK")
</pallas_src>

<mosaic_0001>
module attributes {stable_mosaic.version = 11 : i64} {
  func.func @_neuron_kernel(%arg0: i32, %arg1: memref<2x5x8x1xf32, #tpu.memory_space<vmem>>, %arg2: memref<5x8x1xf32, #tpu.memory_space<vmem>>, %arg3: memref<5x8x4xf32, #tpu.memory_space<vmem>>, %arg4: memref<5x8x4xf32, #tpu.memory_space<vmem>>) attributes {dimension_semantics = [#tpu.dimension_semantics<parallel>], iteration_bounds = array<i64: 1>, scalar_prefetch = 0 : i64, scratch_operands = 0 : i64, tpu.core_type = #tpu.core_type<tc>, window_params = [{pipeline_mode = #tpu.pipeline_mode<synchronous>, transform_indices = @transform_0, window_bounds = array<i64: 2, 5, 8, 1>}, {pipeline_mode = #tpu.pipeline_mode<synchronous>, transform_indices = @transform_1, window_bounds = array<i64: 5, 8, 1>}, {transform_indices = @transform_2, window_bounds = array<i64: 5, 8, 4>}, {transform_indices = @transform_3, window_bounds = array<i64: 5, 8, 4>}]} {
    %c0 = arith.constant 0 : index
    %c0_0 = arith.constant 0 : index
    %c0_1 = arith.constant 0 : index
    %0 = vector.load %arg3[%c0, %c0_0, %c0_1] : memref<5x8x4xf32, #tpu.memory_space<vmem>>, vector<1x8x4xf32>
    %1 = vector.shape_cast %0 : vector<1x8x4xf32> to vector<8x4xf32>
    %c1 = arith.constant 1 : index
    %c0_2 = arith.constant 0 : index
    %c0_3 = arith.constant 0 : index
    %2 = vector.load %arg3[%c1, %c0_2, %c0_3] : memref<5x8x4xf32, #tpu.memory_space<vmem>>, vector<1x8x4xf32>
    %3 = vector.shape_cast %2 : vector<1x8x4xf32> to vector<8x4xf32>
    %c2 = arith.constant 2 : index
    %c0_4 = arith.constant 0 : index
    %c0_5 = arith.constant 0 : index
    %4 = vector.load %arg3[%c2, %c0_4, %c0_5] : memref<5x8x4xf32, #tpu.memory_space<vmem>>, vector<1x8x4xf32>
    %5 = vector.shape_cast %4 : vector<1x8x4xf32> to vector<8x4xf32>
    %c3 = arith.constant 3 : index
    %c0_6 = arith.constant 0 : index
    %c0_7 = arith.constant 0 : index
    %6 = vector.load %arg3[%c3, %c0_6, %c0_7] : memref<5x8x4xf32, #tpu.memory_space<vmem>>, vector<1x8x4xf32>
    %7 = vector.shape_cast %6 : vector<1x8x4xf32> to vector<8x4xf32>
    %c4 = arith.constant 4 : index
    %c0_8 = arith.constant 0 : index
    %c0_9 = arith.constant 0 : index
    %8 = vector.load %arg3[%c4, %c0_8, %c0_9] : memref<5x8x4xf32, #tpu.memory_space<vmem>>, vector<1x8x4xf32>
    %9 = vector.shape_cast %8 : vector<1x8x4xf32> to vector<8x4xf32>
    %c0_10 = arith.constant 0 : index
    %c0_11 = arith.constant 0 : index
    %c0_12 = arith.constant 0 : index
    %c0_13 = arith.constant 0 : index
    %10 = vector.load %arg1[%c0_10, %c0_11, %c0_12, %c0_13] : memref<2x5x8x1xf32, #tpu.memory_space<vmem>>, vector<1x1x8x1xf32>
    %11 = vector.shape_cast %10 : vector<1x1x8x1xf32> to vector<8x1xf32>
    %c0_14 = arith.constant 0 : index
    %c1_15 = arith.constant 1 : index
    %c0_16 = arith.constant 0 : index
    %c0_17 = arith.constant 0 : index
    %12 = vector.load %arg1[%c0_14, %c1_15, %c0_16, %c0_17] : memref<2x5x8x1xf32, #tpu.memory_space<vmem>>, vector<1x1x8x1xf32>
    %13 = vector.shape_cast %12 : vector<1x1x8x1xf32> to vector<8x1xf32>
    %c0_18 = arith.constant 0 : index
    %c2_19 = arith.constant 2 : index
    %c0_20 = arith.constant 0 : index
    %c0_21 = arith.constant 0 : index
    %14 = vector.load %arg1[%c0_18, %c2_19, %c0_20, %c0_21] : memref<2x5x8x1xf32, #tpu.memory_space<vmem>>, vector<1x1x8x1xf32>
    %15 = vector.shape_cast %14 : vector<1x1x8x1xf32> to vector<8x1xf32>
    %c0_22 = arith.constant 0 : index
    %c3_23 = arith.constant 3 : index
    %c0_24 = arith.constant 0 : index
    %c0_25 = arith.constant 0 : index
    %16 = vector.load %arg1[%c0_22, %c3_23, %c0_24, %c0_25] : memref<2x5x8x1xf32, #tpu.memory_space<vmem>>, vector<1x1x8x1xf32>
    %17 = vector.shape_cast %16 : vector<1x1x8x1xf32> to vector<8x1xf32>
    %c0_26 = arith.constant 0 : index
    %c4_27 = arith.constant 4 : index
    %c0_28 = arith.constant 0 : index
    %c0_29 = arith.constant 0 : index
    %18 = vector.load %arg1[%c0_26, %c4_27, %c0_28, %c0_29] : memref<2x5x8x1xf32, #tpu.memory_space<vmem>>, vector<1x1x8x1xf32>
    %19 = vector.shape_cast %18 : vector<1x1x8x1xf32> to vector<8x1xf32>
    %c1_30 = arith.constant 1 : index
    %c0_31 = arith.constant 0 : index
    %c0_32 = arith.constant 0 : index
    %c0_33 = arith.constant 0 : index
    %20 = vector.load %arg1[%c1_30, %c0_31, %c0_32, %c0_33] : memref<2x5x8x1xf32, #tpu.memory_space<vmem>>, vector<1x1x8x1xf32>
    %21 = vector.shape_cast %20 : vector<1x1x8x1xf32> to vector<8x1xf32>
    %c1_34 = arith.constant 1 : index
    %c1_35 = arith.constant 1 : index
    %c0_36 = arith.constant 0 : index
    %c0_37 = arith.constant 0 : index
    %22 = vector.load %arg1[%c1_34, %c1_35, %c0_36, %c0_37] : memref<2x5x8x1xf32, #tpu.memory_space<vmem>>, vector<1x1x8x1xf32>
    %23 = vector.shape_cast %22 : vector<1x1x8x1xf32> to vector<8x1xf32>
    %c1_38 = arith.constant 1 : index
    %c2_39 = arith.constant 2 : index
    %c0_40 = arith.constant 0 : index
    %c0_41 = arith.constant 0 : index
    %24 = vector.load %arg1[%c1_38, %c2_39, %c0_40, %c0_41] : memref<2x5x8x1xf32, #tpu.memory_space<vmem>>, vector<1x1x8x1xf32>
    %25 = vector.shape_cast %24 : vector<1x1x8x1xf32> to vector<8x1xf32>
    %c1_42 = arith.constant 1 : index
    %c3_43 = arith.constant 3 : index
    %c0_44 = arith.constant 0 : index
    %c0_45 = arith.constant 0 : index
    %26 = vector.load %arg1[%c1_42, %c3_43, %c0_44, %c0_45] : memref<2x5x8x1xf32, #tpu.memory_space<vmem>>, vector<1x1x8x1xf32>
    %27 = vector.shape_cast %26 : vector<1x1x8x1xf32> to vector<8x1xf32>
    %c1_46 = arith.constant 1 : index
    %c4_47 = arith.constant 4 : index
    %c0_48 = arith.constant 0 : index
    %c0_49 = arith.constant 0 : index
    %28 = vector.load %arg1[%c1_46, %c4_47, %c0_48, %c0_49] : memref<2x5x8x1xf32, #tpu.memory_space<vmem>>, vector<1x1x8x1xf32>
    %29 = vector.shape_cast %28 : vector<1x1x8x1xf32> to vector<8x1xf32>
    %c0_50 = arith.constant 0 : index
    %c0_51 = arith.constant 0 : index
    %c0_52 = arith.constant 0 : index
    %30 = vector.load %arg2[%c0_50, %c0_51, %c0_52] : memref<5x8x1xf32, #tpu.memory_space<vmem>>, vector<1x8x1xf32>
    %31 = vector.shape_cast %30 : vector<1x8x1xf32> to vector<8x1xf32>
    %c1_53 = arith.constant 1 : index
    %c0_54 = arith.constant 0 : index
    %c0_55 = arith.constant 0 : index
    %32 = vector.load %arg2[%c1_53, %c0_54, %c0_55] : memref<5x8x1xf32, #tpu.memory_space<vmem>>, vector<1x8x1xf32>
    %33 = vector.shape_cast %32 : vector<1x8x1xf32> to vector<8x1xf32>
    %c2_56 = arith.constant 2 : index
    %c0_57 = arith.constant 0 : index
    %c0_58 = arith.constant 0 : index
    %34 = vector.load %arg2[%c2_56, %c0_57, %c0_58] : memref<5x8x1xf32, #tpu.memory_space<vmem>>, vector<1x8x1xf32>
    %35 = vector.shape_cast %34 : vector<1x8x1xf32> to vector<8x1xf32>
    %c3_59 = arith.constant 3 : index
    %c0_60 = arith.constant 0 : index
    %c0_61 = arith.constant 0 : index
    %36 = vector.load %arg2[%c3_59, %c0_60, %c0_61] : memref<5x8x1xf32, #tpu.memory_space<vmem>>, vector<1x8x1xf32>
    %37 = vector.shape_cast %36 : vector<1x8x1xf32> to vector<8x1xf32>
    %c4_62 = arith.constant 4 : index
    %c0_63 = arith.constant 0 : index
    %c0_64 = arith.constant 0 : index
    %38 = vector.load %arg2[%c4_62, %c0_63, %c0_64] : memref<5x8x1xf32, #tpu.memory_space<vmem>>, vector<1x8x1xf32>
    %39 = vector.shape_cast %38 : vector<1x8x1xf32> to vector<8x1xf32>
    %40 = vector.broadcast %11 : vector<8x1xf32> to vector<8x4xf32>
    %41 = arith.mulf %1, %40 : vector<8x4xf32>
    %42 = vector.broadcast %13 : vector<8x1xf32> to vector<8x4xf32>
    %43 = arith.mulf %3, %42 : vector<8x4xf32>
    %44 = arith.addf %41, %43 : vector<8x4xf32>
    %45 = vector.broadcast %15 : vector<8x1xf32> to vector<8x4xf32>
    %46 = arith.mulf %5, %45 : vector<8x4xf32>
    %47 = arith.addf %44, %46 : vector<8x4xf32>
    %48 = vector.broadcast %17 : vector<8x1xf32> to vector<8x4xf32>
    %49 = arith.mulf %7, %48 : vector<8x4xf32>
    %50 = arith.addf %47, %49 : vector<8x4xf32>
    %51 = vector.broadcast %19 : vector<8x1xf32> to vector<8x4xf32>
    %52 = arith.mulf %9, %51 : vector<8x4xf32>
    %53 = arith.addf %50, %52 : vector<8x4xf32>
    %cst = arith.constant 0.000000e+00 : f32
    %54 = vector.broadcast %cst : f32 to vector<8x4xf32>
    %55 = arith.maximumf %53, %54 : vector<8x4xf32>
    %56 = vector.broadcast %21 : vector<8x1xf32> to vector<8x4xf32>
    %57 = arith.mulf %1, %56 : vector<8x4xf32>
    %58 = vector.broadcast %23 : vector<8x1xf32> to vector<8x4xf32>
    %59 = arith.mulf %3, %58 : vector<8x4xf32>
    %60 = arith.addf %57, %59 : vector<8x4xf32>
    %61 = vector.broadcast %25 : vector<8x1xf32> to vector<8x4xf32>
    %62 = arith.mulf %5, %61 : vector<8x4xf32>
    %63 = arith.addf %60, %62 : vector<8x4xf32>
    %64 = vector.broadcast %27 : vector<8x1xf32> to vector<8x4xf32>
    %65 = arith.mulf %7, %64 : vector<8x4xf32>
    %66 = arith.addf %63, %65 : vector<8x4xf32>
    %67 = vector.broadcast %29 : vector<8x1xf32> to vector<8x4xf32>
    %68 = arith.mulf %9, %67 : vector<8x4xf32>
    %69 = arith.addf %66, %68 : vector<8x4xf32>
    %cst_65 = arith.constant 0.000000e+00 : f32
    %70 = vector.broadcast %cst_65 : f32 to vector<8x4xf32>
    %71 = arith.maximumf %69, %70 : vector<8x4xf32>
    %72 = vector.broadcast %11 : vector<8x1xf32> to vector<8x4xf32>
    %73 = arith.mulf %55, %72 : vector<8x4xf32>
    %74 = vector.broadcast %31 : vector<8x1xf32> to vector<8x4xf32>
    %75 = arith.addf %74, %73 : vector<8x4xf32>
    %76 = vector.broadcast %21 : vector<8x1xf32> to vector<8x4xf32>
    %77 = arith.mulf %71, %76 : vector<8x4xf32>
    %78 = arith.addf %75, %77 : vector<8x4xf32>
    %cst_66 = arith.constant 0.000000e+00 : f32
    %79 = vector.broadcast %cst_66 : f32 to vector<8x4xf32>
    %80 = arith.maximumf %78, %79 : vector<8x4xf32>
    %c0_67 = arith.constant 0 : index
    %c0_68 = arith.constant 0 : index
    %c0_69 = arith.constant 0 : index
    %81 = vector.load %arg4[%c0_67, %c0_68, %c0_69] : memref<5x8x4xf32, #tpu.memory_space<vmem>>, vector<1x8x4xf32>
    %82 = vector.shape_cast %81 : vector<1x8x4xf32> to vector<8x4xf32>
    %83 = vector.shape_cast %80 : vector<8x4xf32> to vector<1x8x4xf32>
    tpu.vector_store %arg4[%c0_67, %c0_68, %c0_69], %83 {strides = array<i32>} : memref<5x8x4xf32, #tpu.memory_space<vmem>>, vector<1x8x4xf32>,
    %84 = vector.broadcast %13 : vector<8x1xf32> to vector<8x4xf32>
    %85 = arith.mulf %55, %84 : vector<8x4xf32>
    %86 = vector.broadcast %33 : vector<8x1xf32> to vector<8x4xf32>
    %87 = arith.addf %86, %85 : vector<8x4xf32>
    %88 = vector.broadcast %23 : vector<8x1xf32> to vector<8x4xf32>
    %89 = arith.mulf %71, %88 : vector<8x4xf32>
    %90 = arith.addf %87, %89 : vector<8x4xf32>
    %cst_70 = arith.constant 0.000000e+00 : f32
    %91 = vector.broadcast %cst_70 : f32 to vector<8x4xf32>
    %92 = arith.maximumf %90, %91 : vector<8x4xf32>
    %c1_71 = arith.constant 1 : index
    %c0_72 = arith.constant 0 : index
    %c0_73 = arith.constant 0 : index
    %93 = vector.load %arg4[%c1_71, %c0_72, %c0_73] : memref<5x8x4xf32, #tpu.memory_space<vmem>>, vector<1x8x4xf32>
    %94 = vector.shape_cast %93 : vector<1x8x4xf32> to vector<8x4xf32>
    %95 = vector.shape_cast %92 : vector<8x4xf32> to vector<1x8x4xf32>
    tpu.vector_store %arg4[%c1_71, %c0_72, %c0_73], %95 {strides = array<i32>} : memref<5x8x4xf32, #tpu.memory_space<vmem>>, vector<1x8x4xf32>,
    %96 = vector.broadcast %15 : vector<8x1xf32> to vector<8x4xf32>
    %97 = arith.mulf %55, %96 : vector<8x4xf32>
    %98 = vector.broadcast %35 : vector<8x1xf32> to vector<8x4xf32>
    %99 = arith.addf %98, %97 : vector<8x4xf32>
    %100 = vector.broadcast %25 : vector<8x1xf32> to vector<8x4xf32>
    %101 = arith.mulf %71, %100 : vector<8x4xf32>
    %102 = arith.addf %99, %101 : vector<8x4xf32>
    %cst_74 = arith.constant 0.000000e+00 : f32
    %103 = vector.broadcast %cst_74 : f32 to vector<8x4xf32>
    %104 = arith.maximumf %102, %103 : vector<8x4xf32>
    %c2_75 = arith.constant 2 : index
    %c0_76 = arith.constant 0 : index
    %c0_77 = arith.constant 0 : index
    %105 = vector.load %arg4[%c2_75, %c0_76, %c0_77] : memref<5x8x4xf32, #tpu.memory_space<vmem>>, vector<1x8x4xf32>
    %106 = vector.shape_cast %105 : vector<1x8x4xf32> to vector<8x4xf32>
    %107 = vector.shape_cast %104 : vector<8x4xf32> to vector<1x8x4xf32>
    tpu.vector_store %arg4[%c2_75, %c0_76, %c0_77], %107 {strides = array<i32>} : memref<5x8x4xf32, #tpu.memory_space<vmem>>, vector<1x8x4xf32>,
    %108 = vector.broadcast %17 : vector<8x1xf32> to vector<8x4xf32>
    %109 = arith.mulf %55, %108 : vector<8x4xf32>
    %110 = vector.broadcast %37 : vector<8x1xf32> to vector<8x4xf32>
    %111 = arith.addf %110, %109 : vector<8x4xf32>
    %112 = vector.broadcast %27 : vector<8x1xf32> to vector<8x4xf32>
    %113 = arith.mulf %71, %112 : vector<8x4xf32>
    %114 = arith.addf %111, %113 : vector<8x4xf32>
    %cst_78 = arith.constant 0.000000e+00 : f32
    %115 = vector.broadcast %cst_78 : f32 to vector<8x4xf32>
    %116 = arith.maximumf %114, %115 : vector<8x4xf32>
    %c3_79 = arith.constant 3 : index
    %c0_80 = arith.constant 0 : index
    %c0_81 = arith.constant 0 : index
    %117 = vector.load %arg4[%c3_79, %c0_80, %c0_81] : memref<5x8x4xf32, #tpu.memory_space<vmem>>, vector<1x8x4xf32>
    %118 = vector.shape_cast %117 : vector<1x8x4xf32> to vector<8x4xf32>
    %119 = vector.shape_cast %116 : vector<8x4xf32> to vector<1x8x4xf32>
    tpu.vector_store %arg4[%c3_79, %c0_80, %c0_81], %119 {strides = array<i32>} : memref<5x8x4xf32, #tpu.memory_space<vmem>>, vector<1x8x4xf32>,
    %120 = vector.broadcast %19 : vector<8x1xf32> to vector<8x4xf32>
    %121 = arith.mulf %55, %120 : vector<8x4xf32>
    %122 = vector.broadcast %39 : vector<8x1xf32> to vector<8x4xf32>
    %123 = arith.addf %122, %121 : vector<8x4xf32>
    %124 = vector.broadcast %29 : vector<8x1xf32> to vector<8x4xf32>
    %125 = arith.mulf %71, %124 : vector<8x4xf32>
    %126 = arith.addf %123, %125 : vector<8x4xf32>
    %cst_82 = arith.constant 0.000000e+00 : f32
    %127 = vector.broadcast %cst_82 : f32 to vector<8x4xf32>
    %128 = arith.maximumf %126, %127 : vector<8x4xf32>
    %c4_83 = arith.constant 4 : index
    %c0_84 = arith.constant 0 : index
    %c0_85 = arith.constant 0 : index
    %129 = vector.load %arg4[%c4_83, %c0_84, %c0_85] : memref<5x8x4xf32, #tpu.memory_space<vmem>>, vector<1x8x4xf32>
    %130 = vector.shape_cast %129 : vector<1x8x4xf32> to vector<8x4xf32>
    %131 = vector.shape_cast %128 : vector<8x4xf32> to vector<1x8x4xf32>
    tpu.vector_store %arg4[%c4_83, %c0_84, %c0_85], %131 {strides = array<i32>} : memref<5x8x4xf32, #tpu.memory_space<vmem>>, vector<1x8x4xf32>,
    return
  }
  func.func @transform_0(%arg0: i32) -> (i32, i32, i32, i32) {
    %c0_i32 = arith.constant 0 : i32
    %c0_i32_0 = arith.constant 0 : i32
    %c0_i32_1 = arith.constant 0 : i32
    %c0_i32_2 = arith.constant 0 : i32
    %c0_i32_3 = arith.constant 0 : i32
    return %c0_i32, %c0_i32_0, %c0_i32_1, %c0_i32_2 : i32, i32, i32, i32
  }
  func.func @transform_1(%arg0: i32) -> (i32, i32, i32) {
    %c0_i32 = arith.constant 0 : i32
    %c0_i32_0 = arith.constant 0 : i32
    %c0_i32_1 = arith.constant 0 : i32
    %c0_i32_2 = arith.constant 0 : i32
    return %c0_i32, %c0_i32_0, %c0_i32_1 : i32, i32, i32
  }
  func.func @transform_2(%arg0: i32) -> (i32, i32, i32) {
    %c0_i32 = arith.constant 0 : i32
    %c0_i32_0 = arith.constant 0 : i32
    %c0_i32_1 = arith.constant 0 : i32
    return %c0_i32, %c0_i32_0, %arg0 : i32, i32, i32
  }
  func.func @transform_3(%arg0: i32) -> (i32, i32, i32) {
    %c0_i32 = arith.constant 0 : i32
    %c0_i32_0 = arith.constant 0 : i32
    %c0_i32_1 = arith.constant 0 : i32
    return %c0_i32, %c0_i32_0, %arg0 : i32, i32, i32
  }
}

</mosaic_0001>

<llo_original>
// kernel: tpu_custom_call.1
$region0: #{tpu_custom_call.1}
  #allocation0 [shape = 'u32[]', space=smem, size = 0x4, offset = 0x4, fixed_abs, tag = 'smem constant byte address 0x4 - core index']
  #allocation1 [shape = 'u32[144,128]{1,0:T(1,128)}', space=vmem, size = 0x12000, scoped, tag = 'internal scratch']
  %s0 = inlined_call_operand.vmem [shape: f32[2,5,8,1], index: 0, kind: input, shape index: {}]
  %s1 = inlined_call_operand.vmem [shape: f32[5,8,1], index: 1, kind: input, shape index: {}]
  %s2 = inlined_call_operand.vmem [shape: f32[5,8,4], index: 2, kind: input, shape index: {}]
  %s3 = inlined_call_operand.vmem [shape: f32[5,8,4], index: 3, kind: output, shape index: {}]
  %s4 = sld [smem:[#allocation0]]
  $region22: #{tpu_custom_call.1} parent=0
    _
  %s6 = ssub.s32 1, %s4
  %s7 = scalar_select 0, %s6, %s4
  // Predicated region
  $region2: #{tpu_custom_call.1} parent=0 // pred_check
    _
  $region3: #{tpu_custom_call.1} parent=0 // pred_check_branch
    %9 = sbr.rel (0) target = $region5
  $region4: #{tpu_custom_call.1} parent=0 // pred_region
    _
  $region5: #{tpu_custom_call.1} parent=0 // pred_fallthru
    _
  // Predicated region
  $region6: #{tpu_custom_call.1} parent=0 // pred_check
    _
  $region7: #{tpu_custom_call.1} parent=0 // pred_check_branch
    %11 = sbr.rel (0) target = $region9
  $region8: #{tpu_custom_call.1} parent=0 // pred_region
    _
  $region9: #{tpu_custom_call.1} parent=0 // pred_fallthru
    _
  // Predicated region
  $region10: #{tpu_custom_call.1} parent=0 // pred_check
    _
  $region11: #{tpu_custom_call.1} parent=0 // pred_check_branch
    %13 = sbr.rel (0) target = $region13
  $region12: #{tpu_custom_call.1} parent=0 // pred_region
    _
  $region13: #{tpu_custom_call.1} parent=0 // pred_fallthru
    _
  %v14 = vld [vmem:[%s2] sm:$0xff]
  %s15 = scalar_lea.vmem %s2, 8
  %v16 = vld [vmem:[%s15] sm:$0xff]
  %s17 = scalar_lea.vmem %s2, 16
  %v18 = vld [vmem:[%s17] sm:$0xff]
  %s19 = scalar_lea.vmem %s2, 24
  %v20 = vld [vmem:[%s19] sm:$0xff]
  %s21 = scalar_lea.vmem %s2, 32
  %v22 = vld [vmem:[%s21] sm:$0xff]
  %v23 = vld [vmem:[%s0] sm:$0xff]
  %s24 = scalar_lea.vmem %s0, 8
  %v25 = vld [vmem:[%s24] sm:$0xff]
  %s26 = scalar_lea.vmem %s0, 16
  %v27 = vld [vmem:[%s26] sm:$0xff]
  %s28 = scalar_lea.vmem %s0, 24
  %v29 = vld [vmem:[%s28] sm:$0xff]
  %s30 = scalar_lea.vmem %s0, 32
  %v31 = vld [vmem:[%s30] sm:$0xff]
  %s32 = scalar_lea.vmem %s0, 40
  %v33 = vld [vmem:[%s32] sm:$0xff]
  %s34 = scalar_lea.vmem %s0, 48
  %v35 = vld [vmem:[%s34] sm:$0xff]
  %s36 = scalar_lea.vmem %s0, 56
  %v37 = vld [vmem:[%s36] sm:$0xff]
  %s38 = scalar_lea.vmem %s0, 64
  %v39 = vld [vmem:[%s38] sm:$0xff]
  %s40 = scalar_lea.vmem %s0, 72
  %v41 = vld [vmem:[%s40] sm:$0xff]
  %v42 = vld [vmem:[%s1] sm:$0xff]
  %s43 = scalar_lea.vmem %s1, 8
  %v44 = vld [vmem:[%s43] sm:$0xff]
  %s45 = scalar_lea.vmem %s1, 16
  %v46 = vld [vmem:[%s45] sm:$0xff]
  %s47 = scalar_lea.vmem %s1, 24
  %v48 = vld [vmem:[%s47] sm:$0xff]
  %s49 = scalar_lea.vmem %s1, 32
  %v50 = vld [vmem:[%s49] sm:$0xff]
  %52 = vset.pattern.permute.xlu0 0
  %53 = vperm.xlu0 %52, %v23
  %v54 = vpop.permute.xlu0 %53
  %v56 = vmul.f32 %v14, %v54
  %58 = vset.pattern.permute.xlu0 0
  %59 = vperm.xlu0 %58, %v25
  %v60 = vpop.permute.xlu0 %59
  %v62 = vmul.f32 %v16, %v60
  %v63 = vadd.f32 %v56, %v62
  %65 = vset.pattern.permute.xlu0 0
  %66 = vperm.xlu0 %65, %v27
  %v67 = vpop.permute.xlu0 %66
  %v69 = vmul.f32 %v18, %v67
  %v70 = vadd.f32 %v63, %v69
  %72 = vset.pattern.permute.xlu0 0
  %73 = vperm.xlu0 %72, %v29
  %v74 = vpop.permute.xlu0 %73
  %v76 = vmul.f32 %v20, %v74
  %v77 = vadd.f32 %v70, %v76
  %79 = vset.pattern.permute.xlu0 0
  %80 = vperm.xlu0 %79, %v31
  %v81 = vpop.permute.xlu0 %80
  %v83 = vmul.f32 %v22, %v81
  %v84 = vadd.f32 %v77, %v83
  %v85 = vmax.f32 %v84, 0.0
  %87 = vset.pattern.permute.xlu0 0
  %88 = vperm.xlu0 %87, %v33
  %v89 = vpop.permute.xlu0 %88
  %v91 = vmul.f32 %v14, %v89
  %93 = vset.pattern.permute.xlu0 0
  %94 = vperm.xlu0 %93, %v35
  %v95 = vpop.permute.xlu0 %94
  %v97 = vmul.f32 %v16, %v95
  %v98 = vadd.f32 %v91, %v97
  %100 = vset.pattern.permute.xlu0 0
  %101 = vperm.xlu0 %100, %v37
  %v102 = vpop.permute.xlu0 %101
  %v104 = vmul.f32 %v18, %v102
  %v105 = vadd.f32 %v98, %v104
  %107 = vset.pattern.permute.xlu0 0
  %108 = vperm.xlu0 %107, %v39
  %v109 = vpop.permute.xlu0 %108
  %v111 = vmul.f32 %v20, %v109
  %v112 = vadd.f32 %v105, %v111
  %114 = vset.pattern.permute.xlu0 0
  %115 = vperm.xlu0 %114, %v41
  %v116 = vpop.permute.xlu0 %115
  %v118 = vmul.f32 %v22, %v116
  %v119 = vadd.f32 %v112, %v118
  %v120 = vmax.f32 %v119, 0.0
  %v121 = vmul.f32 %v85, %v54
  %123 = vset.pattern.permute.xlu0 0
  %124 = vperm.xlu0 %123, %v42
  %v125 = vpop.permute.xlu0 %124
  %v127 = vadd.f32 %v125, %v121
  %v128 = vmul.f32 %v120, %v89
  %v129 = vadd.f32 %v127, %v128
  %v130 = vmax.f32 %v129, 0.0
  %vm131 = vcmask 31744
  %132 = vst.msk [vmem:[%s3] sm:$0xff] %vm131, %v130
  %v133 = vmul.f32 %v85, %v60
  %135 = vset.pattern.permute.xlu0 0
  %136 = vperm.xlu0 %135, %v44
  %v137 = vpop.permute.xlu0 %136
  %v139 = vadd.f32 %v137, %v133
  %v140 = vmul.f32 %v120, %v95
  %v141 = vadd.f32 %v139, %v140
  %v142 = vmax.f32 %v141, 0.0
  %s143 = scalar_lea.vmem %s3, 8
  %144 = vst.msk [vmem:[%s143] sm:$0xff] %vm131, %v142
  %v145 = vmul.f32 %v85, %v67
  %147 = vset.pattern.permute.xlu0 0
  %148 = vperm.xlu0 %147, %v46
  %v149 = vpop.permute.xlu0 %148
  %v151 = vadd.f32 %v149, %v145
  %v152 = vmul.f32 %v120, %v102
  %v153 = vadd.f32 %v151, %v152
  %v154 = vmax.f32 %v153, 0.0
  %s155 = scalar_lea.vmem %s3, 16
  %156 = vst.msk [vmem:[%s155] sm:$0xff] %vm131, %v154
  %v157 = vmul.f32 %v85, %v74
  %159 = vset.pattern.permute.xlu0 0
  %160 = vperm.xlu0 %159, %v48
  %v161 = vpop.permute.xlu0 %160
  %v163 = vadd.f32 %v161, %v157
  %v164 = vmul.f32 %v120, %v109
  %v165 = vadd.f32 %v163, %v164
  %v166 = vmax.f32 %v165, 0.0
  %s167 = scalar_lea.vmem %s3, 24
  %168 = vst.msk [vmem:[%s167] sm:$0xff] %vm131, %v166
  %v169 = vmul.f32 %v85, %v81
  %171 = vset.pattern.permute.xlu0 0
  %172 = vperm.xlu0 %171, %v50
  %v173 = vpop.permute.xlu0 %172
  %v175 = vadd.f32 %v173, %v169
  %v176 = vmul.f32 %v120, %v116
  %v177 = vadd.f32 %v175, %v176
  %v178 = vmax.f32 %v177, 0.0
  %s179 = scalar_lea.vmem %s3, 32
  %180 = vst.msk [vmem:[%s179] sm:$0xff] %vm131, %v178
  // Predicated region
  $region14: #{tpu_custom_call.1} parent=0 // pred_check
    _
  $region15: #{tpu_custom_call.1} parent=0 // pred_check_branch
    %182 = sbr.rel (0) target = $region17
  $region16: #{tpu_custom_call.1} parent=0 // pred_region
    _
  $region17: #{tpu_custom_call.1} parent=0 // pred_fallthru
    _
  // Predicated region
  $region18: #{tpu_custom_call.1} parent=0 // pred_check
    _
  $region19: #{tpu_custom_call.1} parent=0 // pred_check_branch
    %184 = sbr.rel (0) target = $region21
  $region20: #{tpu_custom_call.1} parent=0 // pred_region
    _
  $region21: #{tpu_custom_call.1} parent=0 // pred_fallthru
    _

</llo_original>
